<compile_context>
chip_gen: v5e
topology: v5e:2x2
jax: 0.10.0
libtpu: 0.0.40
codegen_flags: <defaults>
</compile_context>

<pallas_src>
import functools

import jax
import jax.numpy as jnp
from jax import lax
from jax.experimental import pallas as pl
from jax.experimental.pallas import tpu as pltpu

_LANE = 128
_ACC_ROWS = 1024                      # fixed accumulator: 1024 x 128 f32 = 512 KiB
_TARGET_BLOCK_BYTES = 4 * 1024 * 1024  # per input, per pipeline buffer


@functools.lru_cache(maxsize=None)
def _num_parallel_splits():
    """2 on chips whose two TensorCores are fed by a 'parallel' grid axis."""
    try:
        dev = jax.devices()[0]
        if dev.platform != "tpu":
            return 1
        kind = dev.device_kind.lower()
    except Exception:
        return 1
    # Megacore (v4 / v5p) and dual-TC (v7x) chips; single-TC v5e/v6e -> 1.
    return 2 if any(tag in kind for tag in ("v4", "v5p", "v7", "7x")) else 1


def _loss_kernel(o_ref, t_ref, part_ref, acc_ref, *,
                 rows, block_rows, acc_rows, chunks, inner_steps,
                 total_blocks, partial_edge, has_phantom, alpha):
    s = pl.program_id(0)
    j = pl.program_id(1)
    is_first = j == 0

    def chunk_contrib(i, mask_base):
        o = o_ref[pl.ds(i * acc_rows, acc_rows), :].astype(jnp.float32)
        t = t_ref[pl.ds(i * acc_rows, acc_rows), :].astype(jnp.float32)
        d = o - t
        prod = o * t
        pen = jnp.sqrt(jnp.maximum(-prod, 0.0))
        if alpha == 1.0:
            c = d * d + pen
        elif alpha == 0.0:
            c = d * d
        else:
            c = d * d + alpha * pen
        if mask_base is not None:
            row_ids = (mask_base + i * acc_rows
                       + lax.broadcasted_iota(jnp.int32, (acc_rows, _LANE), 0))
            c = jnp.where(row_ids < rows, c, 0.0)
        return c

    def accumulate(masked):
        mask_base = (s * inner_steps + j) * block_rows if masked else None
        for i in range(chunks):
            c = chunk_contrib(i, mask_base)
            if i == 0:
                # First inner step overwrites (no zero-fill + reload pass).
                @pl.when(is_first)
                def _():
                    acc_ref[...] = c

                @pl.when(jnp.logical_not(is_first))
                def _():
                    acc_ref[...] += c
            else:
                acc_ref[...] += c

    if not partial_edge and not has_phantom:
        # Every block is full and real: mask-free fast path only.
        accumulate(masked=False)
    else:
        block_idx = s * inner_steps + j
        n_fast = total_blocks - 1 if partial_edge else total_blocks

        @pl.when(block_idx < n_fast)
        def _():
            accumulate(masked=False)

        if partial_edge:
            @pl.when(block_idx == total_blocks - 1)
            def _():
                accumulate(masked=True)
        # Phantom blocks (block_idx >= total_blocks, DMA clamped in-bounds by
        # the index_map) contribute nothing.

    # Single cross-lane reduction per outer split, on the last inner step.
    @pl.when(j == pl.num_programs(1) - 1)
    def _():
        total = jnp.sum(acc_ref[...])
        part_ref[...] = jnp.zeros((1, 8, _LANE), jnp.float32) + total


def custom_mse_loss(output, target, alpha=1.0):
    """Pallas equivalent of CustomMSELoss.forward(output, target)."""
    assert output.shape == target.shape
    n_elems = output.size

    o = output.reshape(-1)
    t = target.reshape(-1)

    # Zero-pad only non-lane-aligned sizes (zeros are exact for both terms).
    # TODO(synk): for non-lane-aligned sizes this pad is still a full copy; a
    # 1D-block kernel with a flat-element-id mask would make it zero-copy.
    pad = (-n_elems) % _LANE
    if pad:
        o = jnp.pad(o, (0, pad))
        t = jnp.pad(t, (0, pad))

    rows = (n_elems + pad) // _LANE
    o2 = o.reshape(rows, _LANE)
    t2 = t.reshape(rows, _LANE)

    # dtype-adaptive block size: ~4 MiB per input per pipeline buffer.
    itemsize = max(o2.dtype.itemsize, t2.dtype.itemsize)
    max_block_rows = max(
        _ACC_ROWS,
        (_TARGET_BLOCK_BYTES // (_LANE * itemsize)) // _ACC_ROWS * _ACC_ROWS)

    if rows <= _ACC_ROWS:
        block_rows = rows          # single full block (== array dims, allowed)
        acc_rows = rows
    else:
        block_rows = min(max_block_rows, (rows // _ACC_ROWS) * _ACC_ROWS)
        acc_rows = _ACC_ROWS
    chunks = block_rows // acc_rows
    total_blocks = pl.cdiv(rows, block_rows)

    # 2-way outer split only where a second TensorCore exists.
    nsplit = 2 if (total_blocks >= 2 and _num_parallel_splits() >= 2) else 1
    inner_steps = pl.cdiv(total_blocks, nsplit)
    has_phantom = nsplit * inner_steps != total_blocks
    partial_edge = (rows % block_rows) != 0

    if has_phantom:
        def in_map(s, j):
            return (jnp.minimum(s * inner_steps + j, total_blocks - 1), 0)
    else:
        def in_map(s, j):
            return (s * inner_steps + j, 0)

    kernel = functools.partial(
        _loss_kernel,
        rows=rows, block_rows=block_rows, acc_rows=acc_rows, chunks=chunks,
        inner_steps=inner_steps, total_blocks=total_blocks,
        partial_edge=partial_edge, has_phantom=has_phantom,
        alpha=float(alpha),  # static; a traced alpha would need SMEM prefetch
    )

    partials = pl.pallas_call(
        kernel,
        out_shape=jax.ShapeDtypeStruct((nsplit, 8, _LANE), jnp.float32),
        grid_spec=pltpu.PrefetchScalarGridSpec(
            num_scalar_prefetch=0,
            grid=(nsplit, inner_steps),
            in_specs=[
                pl.BlockSpec((block_rows, _LANE), in_map),
                pl.BlockSpec((block_rows, _LANE), in_map),
            ],
            out_specs=pl.BlockSpec((1, 8, _LANE), lambda s, j: (s, 0, 0)),
            scratch_shapes=[
                pltpu.VMEM((acc_rows, _LANE), jnp.float32),
            ],
        ),
        compiler_params=pltpu.CompilerParams(
            dimension_semantics=("parallel", "arbitrary"),
            vmem_limit_bytes=48 * 1024 * 1024,
        ),
    )(o2, t2)

    total = jnp.sum(partials[:, 0, 0])   # alpha already folded in-kernel
    return total / jnp.float32(n_elems)


def _reference(output, target, alpha=1.0):
    o = output.astype(jnp.float32)
    t = target.astype(jnp.float32)
    mse = jnp.mean((o - t) ** 2)
    prod = o * t
    pen = alpha * jnp.mean((prod < 0).astype(jnp.float32) * jnp.sqrt(jnp.abs(prod)))
    return mse + pen


if __name__ == "__main__":
    key = jax.random.PRNGKey(0)

    # (shape, alpha): single tiny block, lane-padded, multi-block with masked
    # partial edge + multi-chunk accumulation, and a large odd-sized case that
    # also exercises the phantom-block path on dual-TC chips.
    cases = [
        ((2, 4, 16, 16), 1.0),   # small demo shape: single block, no mask
        ((3, 5, 7), 0.5),        # tiny, needs lane padding
        ((4, 16, 72, 72), 1.0),  # 2 blocks, 2 chunks/block, masked edge block
        ((640037,), 2.0),        # pad + masked edge (+ phantom when nsplit=2)
    ]

    for shape, alpha in cases:
        key, k1, k2 = jax.random.split(key, 3)
        output = jax.random.normal(k1, shape, dtype=jnp.float32)
        target = jax.random.normal(k2, shape, dtype=jnp.float32)

        loss = custom_mse_loss(output, target, alpha=alpha)
        jax.block_until_ready(loss)

        ref = _reference(output, target, alpha=alpha)
        assert jnp.allclose(loss, ref, rtol=1e-4, atol=1e-4), (shape, loss, ref)

    print("KERNEL_OK")
</pallas_src>

<mosaic_0001>
module attributes {stable_mosaic.version = 11 : i64} {
  func.func @_loss_kernel(%arg0: i32, %arg1: i32, %arg2: memref<16x128xf32, #tpu.memory_space<vmem>>, %arg3: memref<16x128xf32, #tpu.memory_space<vmem>>, %arg4: memref<1x8x128xf32, #tpu.memory_space<vmem>>, %arg5: memref<16x128xf32, #tpu.memory_space<vmem>>) attributes {dimension_semantics = [#tpu.dimension_semantics<parallel>, #tpu.dimension_semantics<arbitrary>], iteration_bounds = array<i64: 1, 1>, scalar_prefetch = 0 : i64, scratch_operands = 1 : i64, tpu.core_type = #tpu.core_type<tc>, window_params = [{transform_indices = @transform_0, window_bounds = array<i64: 16, 128>}, {transform_indices = @transform_1, window_bounds = array<i64: 16, 128>}, {transform_indices = @transform_2, window_bounds = array<i64: 1, 8, 128>}]} {
    %c0_i32 = arith.constant 0 : i32
    %0 = arith.cmpi eq, %arg1, %c0_i32 : i32
    %c0 = arith.constant 0 : index
    %c0_0 = arith.constant 0 : index
    %1 = vector.load %arg2[%c0, %c0_0] : memref<16x128xf32, #tpu.memory_space<vmem>>, vector<16x128xf32>
    %c0_1 = arith.constant 0 : index
    %c0_2 = arith.constant 0 : index
    %2 = vector.load %arg3[%c0_1, %c0_2] : memref<16x128xf32, #tpu.memory_space<vmem>>, vector<16x128xf32>
    %3 = arith.subf %1, %2 : vector<16x128xf32>
    %4 = arith.mulf %1, %2 : vector<16x128xf32>
    %cst = arith.constant 0.000000e+00 : f32
    %5 = vector.broadcast %cst : f32 to vector<16x128xf32>
    %6 = arith.subf %5, %4 : vector<16x128xf32>
    %cst_3 = arith.constant 0.000000e+00 : f32
    %7 = vector.broadcast %cst_3 : f32 to vector<16x128xf32>
    %8 = arith.maximumf %6, %7 : vector<16x128xf32>
    %9 = math.sqrt %8 : vector<16x128xf32>
    %10 = arith.mulf %3, %3 : vector<16x128xf32>
    %11 = arith.addf %10, %9 : vector<16x128xf32>
    %12 = arith.extui %0 : i1 to i32
    %c0_i32_4 = arith.constant 0 : i32
    %13 = arith.cmpi ne, %12, %c0_i32_4 : i32
    scf.if %13 {
      %c0_8 = arith.constant 0 : index
      %c0_9 = arith.constant 0 : index
      %20 = vector.load %arg5[%c0_8, %c0_9] : memref<16x128xf32, #tpu.memory_space<vmem>>, vector<16x128xf32>
      tpu.vector_store %arg5[%c0_8, %c0_9], %11 {strides = array<i32>} : memref<16x128xf32, #tpu.memory_space<vmem>>, vector<16x128xf32>,
    } else {
    }
    %true = arith.constant true
    %14 = arith.xori %0, %true : i1
    %15 = arith.extui %14 : i1 to i32
    %c0_i32_5 = arith.constant 0 : i32
    %16 = arith.cmpi ne, %15, %c0_i32_5 : i32
    scf.if %16 {
      %c0_8 = arith.constant 0 : index
      %c0_9 = arith.constant 0 : index
      %20 = vector.load %arg5[%c0_8, %c0_9] : memref<16x128xf32, #tpu.memory_space<vmem>>, vector<16x128xf32>
      %21 = arith.addf %20, %11 : vector<16x128xf32>
      %c0_10 = arith.constant 0 : index
      %c0_11 = arith.constant 0 : index
      %22 = vector.load %arg5[%c0_10, %c0_11] : memref<16x128xf32, #tpu.memory_space<vmem>>, vector<16x128xf32>
      tpu.vector_store %arg5[%c0_10, %c0_11], %21 {strides = array<i32>} : memref<16x128xf32, #tpu.memory_space<vmem>>, vector<16x128xf32>,
    } else {
    }
    %c0_i32_6 = arith.constant 0 : i32
    %17 = arith.cmpi eq, %arg1, %c0_i32_6 : i32
    %18 = arith.extui %17 : i1 to i32
    %c0_i32_7 = arith.constant 0 : i32
    %19 = arith.cmpi ne, %18, %c0_i32_7 : i32
    scf.if %19 {
      %c0_8 = arith.constant 0 : index
      %c0_9 = arith.constant 0 : index
      %20 = vector.load %arg5[%c0_8, %c0_9] : memref<16x128xf32, #tpu.memory_space<vmem>>, vector<16x128xf32>
      %21 = vector.shape_cast %20 : vector<16x128xf32> to vector<1x16x128xf32>
      %cst_10 = arith.constant dense<0.000000e+00> : vector<1xf32>
      %22 = vector.multi_reduction <add>, %21, %cst_10 [1, 2] : vector<1x16x128xf32> to vector<1xf32>
      %23 = vector.shape_cast %22 : vector<1xf32> to vector<1x1x1xf32>
      %24 = vector.extract %23[0, 0, 0] : f32 from vector<1x1x1xf32>
      %cst_11 = arith.constant 0.000000e+00 : f32
      %25 = vector.broadcast %cst_11 : f32 to vector<1x8x128xf32>
      %26 = vector.broadcast %24 : f32 to vector<1x8x128xf32>
      %27 = arith.addf %25, %26 : vector<1x8x128xf32>
      %c0_12 = arith.constant 0 : index
      %c0_13 = arith.constant 0 : index
      %c0_14 = arith.constant 0 : index
      %28 = vector.load %arg4[%c0_12, %c0_13, %c0_14] : memref<1x8x128xf32, #tpu.memory_space<vmem>>, vector<1x8x128xf32>
      tpu.vector_store %arg4[%c0_12, %c0_13, %c0_14], %27 {strides = array<i32>} : memref<1x8x128xf32, #tpu.memory_space<vmem>>, vector<1x8x128xf32>,
    } else {
    }
    return
  }
  func.func @transform_0(%arg0: i32, %arg1: i32) -> (i32, i32) {
    %c1_i32 = arith.constant 1 : i32
    %0 = arith.muli %arg0, %c1_i32 : i32
    %1 = arith.addi %0, %arg1 : i32
    %c0_i32 = arith.constant 0 : i32
    %c0_i32_0 = arith.constant 0 : i32
    return %1, %c0_i32 : i32, i32
  }
  func.func @transform_1(%arg0: i32, %arg1: i32) -> (i32, i32) {
    %c1_i32 = arith.constant 1 : i32
    %0 = arith.muli %arg0, %c1_i32 : i32
    %1 = arith.addi %0, %arg1 : i32
    %c0_i32 = arith.constant 0 : i32
    %c0_i32_0 = arith.constant 0 : i32
    return %1, %c0_i32 : i32, i32
  }
  func.func @transform_2(%arg0: i32, %arg1: i32) -> (i32, i32, i32) {
    %c0_i32 = arith.constant 0 : i32
    %c0_i32_0 = arith.constant 0 : i32
    %c0_i32_1 = arith.constant 0 : i32
    return %arg0, %c0_i32, %c0_i32_0 : i32, i32, i32
  }
}

</mosaic_0001>

<llo_original>
// kernel: tpu_custom_call.1
$region0: #{tpu_custom_call.1}
  #allocation0 [shape = 'u32[]', space=smem, size = 0x4, offset = 0x4, fixed_abs, tag = 'smem constant byte address 0x4 - core index']
  #allocation1 [shape = 'u32[72,128]{1,0:T(1,128)}', space=vmem, size = 0x9000, scoped, tag = 'internal scratch']
  #allocation2 [shape = 'f32[16,128]{1,0:T(8,128)}', space=vmem, size = 0x2000, scoped, tag = 'scratch operand']
  %s0 = inlined_call_operand.hbm [shape: f32[16,128], index: 0, kind: input, shape index: {}]
  %s1 = inlined_call_operand.hbm [shape: f32[16,128], index: 1, kind: input, shape index: {}]
  %s2 = inlined_call_operand.hbm [shape: f32[1,8,128], index: 2, kind: output, shape index: {}]
  %s3 = sld [smem:[#allocation0]]
  $region38: #{tpu_custom_call.1} parent=0
    _
  %s5 = ssub.s32 1, %s3
  %s6 = scalar_select 0, %s5, %s3
  $region1: #{tpu_custom_call.1} parent=0
    #allocation3 [shape = 'u8[8192]{0}', space=vmem, size = 0x2000, scoped, tag = 'input window, operand 0, single buffered']
    #allocation4 [shape = 's32[1]{0}', space=sflag, size = 0x4, scoped, tag = 'scoped memory for tpu_custom_call.1']
    #allocation5 [shape = 's32[1]{0}', space=sflag, size = 0x4, scoped, tag = 'scoped memory for tpu_custom_call.1']
    #allocation6 [shape = 'u8[8192]{0}', space=vmem, size = 0x2000, scoped, tag = 'input window, operand 1, single buffered']
    #allocation7 [shape = 's32[1]{0}', space=sflag, size = 0x4, scoped, tag = 'scoped memory for tpu_custom_call.1']
    #allocation8 [shape = 'u8[4096]{0}', space=vmem, size = 0x1000, scoped, tag = 'output window, operand 0, single buffered']
    %7 = vsyncpa [#allocation4], 0
    %8 = vsyncpa [#allocation7], 0
    %9 = vsyncpa [#allocation5], 0
    // Predicated region
    $region2: #{tpu_custom_call.1} parent=1 // pred_check
      _
    $region3: #{tpu_custom_call.1} parent=1 // pred_check_branch
      %11 = sbr.rel (0) target = $region5
    $region4: #{tpu_custom_call.1} parent=1 // pred_region
      %s12 = sadd.s32 0, 0
      %s13 = smul.u32 2, %s12
      %15 = vsyncadd [#allocation4], 0
      %s16 = smul.addr %s13, 8
      %s17 = scalar_lea.hbm %s0, %s16
      %s18 = sshll.u32 %s17, 4
      %s19 = int_to_ptr.hbm [resolvable:$true] %s18
      %s20 = sshll.u32 [#allocation3], 4
      %s21 = int_to_ptr.vmem [resolvable:$true] %s20
      %26 = dma.hbm_to_vmem [thread:$0]  %s19, 256, %s21, [#allocation4], 128, 128, 8
    $region5: #{tpu_custom_call.1} parent=1 // pred_fallthru
      _
    // Predicated region
    $region6: #{tpu_custom_call.1} parent=1 // pred_check
      _
    $region7: #{tpu_custom_call.1} parent=1 // pred_check_branch
      %28 = sbr.rel (0) target = $region9
    $region8: #{tpu_custom_call.1} parent=1 // pred_region
      %s29 = sadd.s32 0, 0
      %s30 = smul.u32 2, %s29
      %32 = vsyncadd [#allocation7], 0
      %s33 = smul.addr %s30, 8
      %s34 = scalar_lea.hbm %s1, %s33
      %s35 = sshll.u32 %s34, 4
      %s36 = int_to_ptr.hbm [resolvable:$true] %s35
      %s37 = sshll.u32 [#allocation6], 4
      %s38 = int_to_ptr.vmem [resolvable:$true] %s37
      %43 = dma.hbm_to_vmem [thread:$0]  %s36, 256, %s38, [#allocation7], 128, 128, 8
    $region9: #{tpu_custom_call.1} parent=1 // pred_fallthru
      _
    // Predicated region
    $region10: #{tpu_custom_call.1} parent=1 // pred_check
      _
    $region11: #{tpu_custom_call.1} parent=1 // pred_check_branch
      %45 = sbr.rel (0) target = $region13
    $region12: #{tpu_custom_call.1} parent=1 // pred_region
      %47 = dma.done [#allocation4], 256
    $region13: #{tpu_custom_call.1} parent=1 // pred_fallthru
      _
    // Predicated region
    $region14: #{tpu_custom_call.1} parent=1 // pred_check
      _
    $region15: #{tpu_custom_call.1} parent=1 // pred_check_branch
      %49 = sbr.rel (0) target = $region17
    $region16: #{tpu_custom_call.1} parent=1 // pred_region
      %51 = dma.done [#allocation7], 256
    $region17: #{tpu_custom_call.1} parent=1 // pred_fallthru
      _
    %s52 = sadd.s32 0, 0
    %s53 = smul.u32 2, %s52
    %s54 = sadd.s32 0, 0
    %s55 = smul.u32 2, %s54
    %p56 = scmp.eq.s32.totalorder 0, 0
    %v57 = vld [vmem:[#allocation3] sm:$0xff]
    %v58 = vld [vmem:[#allocation3 + $0x8] sm:$0xff]
    %v59 = vld [vmem:[#allocation6] sm:$0xff]
    %v60 = vld [vmem:[#allocation6 + $0x8] sm:$0xff]
    %v61 = vsub.f32 %v57, %v59
    %v62 = vsub.f32 %v58, %v60
    %v63 = vmul.f32 %v57, %v59
    %v64 = vmul.f32 %v58, %v60
    %v65 = vsub.f32 0.0, %v63
    %v66 = vsub.f32 0.0, %v64
    %v67 = vmax.f32 %v65, 0.0
    %v68 = vmax.f32 %v66, 0.0
    %v69 = vrsqrt.pop %v67
    %v70 = vmul.f32 %v69, %v67
    %v71 = vmul.f32 %v70, %v69
    %v72 = vmul.f32 0.5, %v71
    %v73 = vsub.f32 1.5, %v72
    %v74 = vmul.f32 %v69, %v73
    %v75 = vmul.f32 %v67, %v74
    %vm76 = vcmp.eq.f32.partialorder %v67, inf
    %v77 = vsel %vm76, %v67, %v75
    %vm78 = vcmp.eq.f32.partialorder %v67, 0.0
    %v79 = vand.u32 %v67, 2147483648
    %v80 = vsel %vm78, %v79, %v77
    %v81 = vrsqrt.pop %v68
    %v82 = vmul.f32 %v81, %v68
    %v83 = vmul.f32 %v82, %v81
    %v84 = vmul.f32 0.5, %v83
    %v85 = vsub.f32 1.5, %v84
    %v86 = vmul.f32 %v81, %v85
    %v87 = vmul.f32 %v68, %v86
    %vm88 = vcmp.eq.f32.partialorder %v68, inf
    %v89 = vsel %vm88, %v68, %v87
    %vm90 = vcmp.eq.f32.partialorder %v68, 0.0
    %v91 = vand.u32 %v68, 2147483648
    %v92 = vsel %vm90, %v91, %v89
    %v93 = vmul.f32 %v61, %v61
    %v94 = vmul.f32 %v62, %v62
    %v95 = vadd.f32 %v93, %v80
    %v96 = vadd.f32 %v94, %v92
    // Predicated region
    $region18: #{tpu_custom_call.1} parent=1 // pred_check
      %p97 = pneg %p56
    $region19: #{tpu_custom_call.1} parent=1 // pred_check_branch
      %99 = sbr.rel (%p97) target = $region21
    $region20: #{tpu_custom_call.1} parent=1 // pred_region
      %100 = vst [vmem:[#allocation2] sm:$0xff] %v95
      %101 = vst [vmem:[#allocation2 + $0x8] sm:$0xff] %v96
    $region21: #{tpu_custom_call.1} parent=1 // pred_fallthru
      _
    %p102 = scmp.ne.s32.totalorder 0, 0
    // Predicated region
    $region22: #{tpu_custom_call.1} parent=1 // pred_check
      %p103 = pneg %p102
    $region23: #{tpu_custom_call.1} parent=1 // pred_check_branch
      %105 = sbr.rel (%p103) target = $region25
    $region24: #{tpu_custom_call.1} parent=1 // pred_region
      %v106 = vld [vmem:[#allocation2] sm:$0xff]
      %v107 = vld [vmem:[#allocation2 + $0x8] sm:$0xff]
      %v108 = vadd.f32 %v106, %v95
      %v109 = vadd.f32 %v107, %v96
      %110 = vst [vmem:[#allocation2] sm:$0xff] %v108
      %111 = vst [vmem:[#allocation2 + $0x8] sm:$0xff] %v109
    $region25: #{tpu_custom_call.1} parent=1 // pred_fallthru
      _
    // Predicated region
    $region26: #{tpu_custom_call.1} parent=1 // pred_check
      %p112 = pneg %p56
    $region27: #{tpu_custom_call.1} parent=1 // pred_check_branch
      %114 = sbr.rel (%p112) target = $region29
    $region28: #{tpu_custom_call.1} parent=1 // pred_region
      %v115 = vld [vmem:[#allocation2] sm:$0xff]
      %v116 = vld [vmem:[#allocation2 + $0x8] sm:$0xff]
      %v117 = vadd.f32 %v115, %v116
      %118 = vadd.xlane.f32.xlu0 %v117
      %v119 = vpop.xlane.xlu0 %118
      %v120 = vrot.slane %v119, 4
      %v121 = vadd.f32 %v119, %v120
      %v122 = vrot.slane %v121, 2
      %v123 = vadd.f32 %v121, %v122
      %v124 = vrot.slane %v123, 1
      %v125 = vadd.f32 %v123, %v124
      %s126 = vtos %v125
      %v127 = vstv %s126
      %v128 = vadd.f32 %v127, 0.0
      %129 = vst [vmem:[#allocation8] sm:$0xff] %v128
    $region29: #{tpu_custom_call.1} parent=1 // pred_fallthru
      _
    // Predicated region
    $region30: #{tpu_custom_call.1} parent=1 // pred_check
      _
    $region31: #{tpu_custom_call.1} parent=1 // pred_check_branch
      %131 = sbr.rel (0) target = $region33
    $region32: #{tpu_custom_call.1} parent=1 // pred_region
      %133 = vsyncadd [#allocation5], 0
      %s135 = sshll.u32 [#allocation8], 4
      %s136 = int_to_ptr.vmem [resolvable:$true] %s135
      %s137 = sshll.u32 %s2, 4
      %s138 = int_to_ptr.hbm [resolvable:$true] %s137
      %140 = dma.vmem_to_hbm [thread:$0]  %s136, 128, %s138, [#allocation5]
    $region33: #{tpu_custom_call.1} parent=1 // pred_fallthru
      _
    // Predicated region
    $region34: #{tpu_custom_call.1} parent=1 // pred_check
      _
    $region35: #{tpu_custom_call.1} parent=1 // pred_check_branch
      %142 = sbr.rel (0) target = $region37
    $region36: #{tpu_custom_call.1} parent=1 // pred_region
      %144 = dma.done [#allocation5], 128
    $region37: #{tpu_custom_call.1} parent=1 // pred_fallthru
      _
    %145 = vsyncpa [#allocation4], 1
    %146 = vsyncpa [#allocation7], 1
    %147 = vsyncpa [#allocation5], 1

</llo_original>
